<compile_context>
chip_gen: v7x
topology: tpu7x:2x2x1
jax: 0.10.0
libtpu: 0.0.40
codegen_flags: <defaults>
</compile_context>

<pallas_src>
import functools

import jax
import jax.numpy as jnp
from jax.experimental import pallas as pl
from jax.experimental.pallas import tpu as pltpu


def _h_swish_kernel(x_ref, o_ref, *, compute_dtype):
    # x_ref / o_ref: (block_rows, LANE) tiles.
    x = x_ref[...].astype(compute_dtype)
    # h_sigmoid(x) = relu6(x + 3) / 6 ; h_swish(x) = x * h_sigmoid(x)
    y = x * (jnp.clip(x + 3.0, 0.0, 6.0) * (1.0 / 6.0))
    o_ref[...] = y.astype(o_ref.dtype)


def _h_swish_jnp(x):
    """Plain-jnp h_swish for tiny tails / tiny arrays."""
    xf = x.astype(jnp.float32)
    return (xf * (jnp.clip(xf + 3.0, 0.0, 6.0) * (1.0 / 6.0))).astype(x.dtype)


def _tpu_generation():
    try:
        kind = jax.devices()[0].device_kind.lower()
    except Exception:
        return 0
    for g in (7, 6, 5, 4, 3, 2):
        if f"v{g}" in kind:
            return g
    return 0


def _h_swish_rows(x2, *, target_block_bytes, compute_dtype, donate):
    """Run the kernel over a lane-dense (rows, lane) slab."""
    rows, lane = x2.shape
    dtype = x2.dtype
    itemsize = jnp.dtype(dtype).itemsize

    # Sublane granularity: 8 rows for 32-bit, 16 for bf16, 32 for int8 (packed).
    sub = 8 * max(1, 4 // itemsize)

    bytes_per_row = lane * itemsize
    block_rows = max(sub, (target_block_bytes // bytes_per_row) // sub * sub)

    # Keep >= ~8 grid steps on mid/large tensors so v7x megacore sharding and
    # the software pipeline stay fed, before letting blocks grow to full size.
    min_steps = 8
    if rows >= min_steps * sub:
        block_rows = min(block_rows, max(sub, (rows // min_steps) // sub * sub))

    if rows <= block_rows:
        # Single block equal to the full array dims (the (8,128) divisibility
        # rule does not apply when block dims equal the array dims).
        block_rows = rows
        grid = (1,)
    else:
        # Ragged last block: OOB reads are garbage but the op is pointwise and
        # the corresponding OOB writes are dropped, so it is harmless.
        grid = (pl.cdiv(rows, block_rows),)

    n_elems = rows * lane
    flops_per_elem = 5 + (2 if jnp.dtype(compute_dtype) != jnp.dtype(dtype) else 0)

    kernel = functools.partial(_h_swish_kernel, compute_dtype=compute_dtype)
    return pl.pallas_call(
        kernel,
        out_shape=jax.ShapeDtypeStruct((rows, lane), dtype),
        grid_spec=pltpu.PrefetchScalarGridSpec(
            num_scalar_prefetch=0,
            grid=grid,
            in_specs=[pl.BlockSpec((block_rows, lane), lambda i: (i, 0))],
            out_specs=pl.BlockSpec((block_rows, lane), lambda i: (i, 0)),
        ),
        compiler_params=pltpu.CompilerParams(
            dimension_semantics=("parallel",),
        ),
        cost_estimate=pl.CostEstimate(
            flops=flops_per_elem * n_elems,
            transcendentals=0,
            bytes_accessed=2 * n_elems * itemsize,  # streamed read x + write y
        ),
        input_output_aliases=({0: 0} if donate else {}),
    )(x2)


def h_swish(x, *, lane=None, target_block_bytes=None, donate_input=False):
    """Elementwise h_swish over an array of any shape (NCHW in MobileNetV3)."""
    orig_shape = x.shape
    dtype = x.dtype
    n = x.size
    if n == 0:
        return x

    gen = _tpu_generation()
    if target_block_bytes is None:
        # 4 MiB blocks on v6e/v7x (double-buffered in+out = 16 MiB, fits the
        # 32 MiB scoped-VMEM default); 2 MiB on v5e (16 MiB scoped default).
        target_block_bytes = (4 << 20) if gen >= 6 else (2 << 20)

    # Native bf16 math on bf16-capable VPUs (v6e/v7x); f32 internally otherwise.
    if jnp.dtype(dtype) == jnp.dtype(jnp.bfloat16) and gen >= 6:
        compute_dtype = jnp.bfloat16
    else:
        compute_dtype = jnp.float32

    # Pick the widest 128-multiple lane count that divides n so the common case
    # needs no padding, no tail handling, and no extra HBM copies at all.
    if lane is None:
        for cand in (512, 256, 128):
            if n % cand == 0:
                lane = cand
                break
        else:
            lane = 512  # ragged tail handled below

    flat = x.reshape(-1)
    n_main = (n // lane) * lane

    if n_main == 0:
        # Tiny array: not worth a kernel launch.
        return _h_swish_jnp(x)

    if n_main == n:
        out = _h_swish_rows(
            flat.reshape(n // lane, lane),
            target_block_bytes=target_block_bytes,
            compute_dtype=compute_dtype,
            donate=donate_input,
        )
        return out.reshape(orig_shape)

    # Unaligned size: run the aligned prefix through the kernel and compute the
    # tiny (< lane elements) tail with plain jnp — avoids padding/slicing the
    # whole array (a full extra HBM read+write of x in the previous version).
    main = flat[:n_main].reshape(n_main // lane, lane)
    out_main = _h_swish_rows(
        main,
        target_block_bytes=target_block_bytes,
        compute_dtype=compute_dtype,
        donate=False,
    )
    out_tail = _h_swish_jnp(flat[n_main:])
    return jnp.concatenate([out_main.reshape(-1), out_tail]).reshape(orig_shape)


def h_swish_ref(x):
    """Pure-JAX reference mirroring the PyTorch forward."""
    return x * (jnp.clip(x + 3.0, 0.0, 6.0) / 6.0)


if __name__ == "__main__":
    key = jax.random.PRNGKey(0)
    k0, k1, k2 = jax.random.split(key, 3)

    # Primary shape implied by the module (NCHW activations).
    B, C, H, W = 2, 4, 16, 16
    x = jax.random.normal(k0, (B, C, H, W), dtype=jnp.float32) * 3.0
    out = jax.block_until_ready(h_swish(x))
    assert out.shape == (B, C, H, W)
    assert out.dtype == x.dtype
    assert jnp.allclose(out, h_swish_ref(x), atol=1e-5, rtol=1e-5), "mismatch (aligned path)"

    # Unaligned element count -> aligned-prefix kernel + tiny jnp tail.
    y = jax.random.normal(k1, (3, 5, 7, 11), dtype=jnp.float32) * 3.0
    out_y = jax.block_until_ready(h_swish(y))
    assert jnp.allclose(out_y, h_swish_ref(y), atol=1e-5, rtol=1e-5), "mismatch (tail path)"

    # Multi-block grid with a ragged last block (cdiv masking path).
    z = jax.random.normal(k2, (2, 24, 28, 28), dtype=jnp.float32) * 3.0
    out_z = jax.block_until_ready(h_swish(z, target_block_bytes=64 << 10))
    assert jnp.allclose(out_z, h_swish_ref(z), atol=1e-5, rtol=1e-5), "mismatch (ragged block path)"

    print("KERNEL_OK")
</pallas_src>

<mosaic_0001>
module attributes {stable_mosaic.version = 11 : i64} {
  func.func @_h_swish_kernel(%arg0: i32, %arg1: memref<4x512xf32, #tpu.memory_space<vmem>>, %arg2: memref<4x512xf32, #tpu.memory_space<vmem>>) attributes {dimension_semantics = [#tpu.dimension_semantics<parallel>], iteration_bounds = array<i64: 1>, scalar_prefetch = 0 : i64, scratch_operands = 0 : i64, tpu.core_type = #tpu.core_type<tc>, window_params = [{transform_indices = @transform_0, window_bounds = array<i64: 4, 512>}, {transform_indices = @transform_1, window_bounds = array<i64: 4, 512>}]} {
    %c0 = arith.constant 0 : index
    %c0_0 = arith.constant 0 : index
    %0 = vector.load %arg1[%c0, %c0_0] : memref<4x512xf32, #tpu.memory_space<vmem>>, vector<4x512xf32>
    %cst = arith.constant 3.000000e+00 : f32
    %1 = vector.broadcast %cst : f32 to vector<4x512xf32>
    %2 = arith.addf %0, %1 : vector<4x512xf32>
    %cst_1 = arith.constant 0.000000e+00 : f32
    %cst_2 = arith.constant 6.000000e+00 : f32
    %3 = vector.broadcast %cst_1 : f32 to vector<4x512xf32>
    %4 = arith.maximumf %3, %2 : vector<4x512xf32>
    %5 = vector.broadcast %cst_2 : f32 to vector<4x512xf32>
    %6 = arith.minimumf %5, %4 : vector<4x512xf32>
    %cst_3 = arith.constant 0.166666672 : f32
    %7 = vector.broadcast %cst_3 : f32 to vector<4x512xf32>
    %8 = arith.mulf %6, %7 : vector<4x512xf32>
    %9 = arith.mulf %0, %8 : vector<4x512xf32>
    %c0_4 = arith.constant 0 : index
    %c0_5 = arith.constant 0 : index
    %10 = vector.load %arg2[%c0_4, %c0_5] : memref<4x512xf32, #tpu.memory_space<vmem>>, vector<4x512xf32>
    tpu.vector_store %arg2[%c0_4, %c0_5], %9 {strides = array<i32>} : memref<4x512xf32, #tpu.memory_space<vmem>>, vector<4x512xf32>,
    return
  }
  func.func @transform_0(%arg0: i32) -> (i32, i32) {
    %c0_i32 = arith.constant 0 : i32
    %c0_i32_0 = arith.constant 0 : i32
    return %arg0, %c0_i32 : i32, i32
  }
  func.func @transform_1(%arg0: i32) -> (i32, i32) {
    %c0_i32 = arith.constant 0 : i32
    %c0_i32_0 = arith.constant 0 : i32
    return %arg0, %c0_i32 : i32, i32
  }
}

</mosaic_0001>

<llo_original>
// kernel: tpu_custom_call.1
$region0: #{tpu_custom_call.1}
  #allocation0 [shape = 'u32[]', space=smem, size = 0x4, offset = 0x4, fixed_abs, tag = 'smem constant byte address 0x4 - core index']
  #allocation1 [shape = 'u32[144,128]{1,0:T(1,128)}', space=vmem, size = 0x12000, scoped, tag = 'internal scratch']
  %s0 = inlined_call_operand.hbm [shape: f32[4,512], index: 0, kind: input, shape index: {}]
  %s1 = inlined_call_operand.hbm [shape: f32[4,512], index: 1, kind: output, shape index: {}]
  %s2 = sld [smem:[#allocation0]]
  $region18: #{tpu_custom_call.1} parent=0
    _
  %s4 = ssub.s32 1, %s2
  %s5 = scalar_select 0, %s4, %s2
  $region1: #{tpu_custom_call.1} parent=0
    #allocation2 [shape = 'u8[8192]{0}', space=vmem, size = 0x2000, scoped, tag = 'input window, operand 0, single buffered']
    #allocation3 [shape = 's32[1]{0}', space=sflag, size = 0x4, scoped, tag = 'scoped memory for tpu_custom_call.1']
    #allocation4 [shape = 's32[1]{0}', space=sflag, size = 0x4, scoped, tag = 'scoped memory for tpu_custom_call.1']
    #allocation5 [shape = 'u8[8192]{0}', space=vmem, size = 0x2000, scoped, tag = 'output window, operand 0, single buffered']
    %6 = vsyncpa [#allocation3], 0
    %7 = vsyncpa [#allocation4], 0
    // Predicated region
    $region2: #{tpu_custom_call.1} parent=1 // pred_check
      _
    $region3: #{tpu_custom_call.1} parent=1 // pred_check_branch
      %9 = sbr.rel (0) target = $region5
    $region4: #{tpu_custom_call.1} parent=1 // pred_region
      %s11 = ssub.s32 256, 256
      %12 = vsyncadd [#allocation3], %s11
      %s14 = sshll.u32 [#allocation2], 4
      %s15 = int_to_ptr.vmem [resolvable:$true] %s14
      %17 = dma.hbm_to_vmem [thread:$0]  %s0, 256, %s15, [#allocation3]
    $region5: #{tpu_custom_call.1} parent=1 // pred_fallthru
      _
    // Predicated region
    $region6: #{tpu_custom_call.1} parent=1 // pred_check
      _
    $region7: #{tpu_custom_call.1} parent=1 // pred_check_branch
      %19 = sbr.rel (0) target = $region9
    $region8: #{tpu_custom_call.1} parent=1 // pred_region
      %20 = dma.done [#allocation3], 256
    $region9: #{tpu_custom_call.1} parent=1 // pred_fallthru
      _
    %v21 = vld [vmem:[#allocation2] sm:$0xff]
    %v22 = vld [vmem:[#allocation2 + $0x8] sm:$0xff]
    %v23 = vadd.f32 %v21, 3.0
    %v24 = vadd.f32 %v22, 3.0
    %v25 = vmax.f32 %v23, 0.0
    %v26 = vmax.f32 %v24, 0.0
    %v27 = vmin.f32 %v25, 6.0
    %v28 = vmin.f32 %v26, 6.0
    %v29 = vmul.f32 %v27, 0.16666667
    %v30 = vmul.f32 %v28, 0.16666667
    %v31 = vmul.f32 %v21, %v29
    %v32 = vmul.f32 %v22, %v30
    %33 = vst [vmem:[#allocation5] sm:$0xff] %v31
    %34 = vst [vmem:[#allocation5 + $0x8] sm:$0xff] %v32
    // Predicated region
    $region10: #{tpu_custom_call.1} parent=1 // pred_check
      _
    $region11: #{tpu_custom_call.1} parent=1 // pred_check_branch
      %36 = sbr.rel (0) target = $region13
    $region12: #{tpu_custom_call.1} parent=1 // pred_region
      %s38 = ssub.s32 256, 256
      %39 = vsyncadd [#allocation4], %s38
      %s41 = sshll.u32 [#allocation5], 4
      %s42 = int_to_ptr.vmem [resolvable:$true] %s41
      %44 = dma.vmem_to_hbm [thread:$0]  %s42, 256, %s1, [#allocation4]
    $region13: #{tpu_custom_call.1} parent=1 // pred_fallthru
      _
    // Predicated region
    $region14: #{tpu_custom_call.1} parent=1 // pred_check
      _
    $region15: #{tpu_custom_call.1} parent=1 // pred_check_branch
      %46 = sbr.rel (0) target = $region17
    $region16: #{tpu_custom_call.1} parent=1 // pred_region
      %47 = dma.done [#allocation4], 256
    $region17: #{tpu_custom_call.1} parent=1 // pred_fallthru
      _
    %48 = vsyncpa [#allocation3], 1
    %49 = vsyncpa [#allocation4], 1

</llo_original>
